<compile_context>
chip_gen: v7x
topology: tpu7x:2x2x1
jax: 0.10.0
libtpu: 0.0.40
codegen_flags: <defaults>
</compile_context>

<pallas_src>
import jax
import jax.numpy as jnp
from jax.experimental import pallas as pl
from jax.experimental.pallas import tpu as pltpu


def _topo_kernel(se_ref, sa_ref, e2e_ref, e2a_ref, out_ref):
    """One (class-block, layer) grid step.

    se_ref  : (layers,)              f32, SMEM   e2e scaling (flattened)
    sa_ref  : (layers,)              f32, SMEM   e2a scaling (flattened)
    e2e_ref : (Ccls, n_set, NT2)     bf16, VMEM  packed e2e attention block
    e2a_ref : (Ccls, n_set, NT2)     bf16, VMEM  packed e2a attention block
    out_ref : (Ccls, 1, n_set, NT2)  f32,  VMEM  scaled & summed output
    """
    layer = pl.program_id(1)
    se = se_ref[layer]
    sa = sa_ref[layer]
    # Single-use loads feeding one fused elementwise expression consumed
    # directly by the store: no values are held live across a layer loop, so
    # there is no vreg-pressure / spill issue (review item).
    res = (se * e2e_ref[...].astype(jnp.float32)
           + sa * e2a_ref[...].astype(jnp.float32))
    out_ref[...] = jnp.expand_dims(res, axis=1)


def _padded_rows(n, dtype_bytes):
    # Second-to-last-dim VMEM tile granule: 8 (f32), 16 (bf16), 32 (int8).
    g = 8 * max(1, 4 // dtype_bytes)
    return -(-n // g) * g


def _vmem_block_budget():
    """Generation-aware cap on the double-buffered block working set."""
    try:
        cap = pltpu.get_tpu_info().vmem_capacity_bytes
    except Exception:
        cap = 64 * 1024 * 1024  # conservative: v7x per-TensorCore VMEM
    return min(16 * 1024 * 1024, cap // 4)


def _has_two_tensorcores():
    """Only chips with 2 TensorCores benefit from an even number of parallel
    grid steps; on single-TC parts (v5e/v6e) just take the largest block."""
    try:
        kind = jax.devices()[0].device_kind.lower()
    except Exception:
        return False
    return any(t in kind for t in ("v7", "v4", "v5p"))


def _choose_cls_block(n_cls, n_set, nt2, in_bytes, out_bytes, budget):
    """Classes per grid step: a divisor of n_cls whose double-buffered
    input + output blocks fit the VMEM budget (accounting for sublane/lane
    tile padding)."""
    lanes = -(-nt2 // 128) * 128
    per_cls = 2 * (2 * _padded_rows(n_set, in_bytes) * lanes * in_bytes
                   + _padded_rows(n_set, out_bytes) * lanes * out_bytes)
    cap = max(1, budget // per_cls)
    divisors = [d for d in range(1, n_cls + 1) if n_cls % d == 0 and d <= cap]
    if not divisors:
        return 1
    best = max(divisors)
    if _has_two_tensorcores():
        even = [d for d in divisors if (n_cls // d) % 2 == 0]
        if even:
            best = max(even)
    return best


class TopoPromptLearnerPallas:
    """Pallas port of TopoPromptLearner's forward.

    The constant attention slabs are packed once here (init), not per call."""

    def __init__(self, classnames, attns_e2e, attns_e2a):
        self.classnames = list(classnames)
        e2e = jnp.stack([jnp.stack(attns_e2e[c]) for c in self.classnames])
        e2a = jnp.stack([jnp.stack(attns_e2a[c]) for c in self.classnames])
        self.n_cls, self.n_set, self.nt, _ = e2e.shape
        self.nt2 = self.nt * self.nt
        # Constant slabs in bf16: attention values are small integer counts,
        # so bf16 is exact and halves kernel input HBM traffic (review item).
        self._e2e = e2e.reshape(self.n_cls, self.n_set, self.nt2).astype(jnp.bfloat16)
        self._e2a = e2a.reshape(self.n_cls, self.n_set, self.nt2).astype(jnp.bfloat16)

    def packed(self, e2e_scal, e2a_scal):
        """Packed class-major output (n_cls, layers, n_set, nt, nt).
        Prefer this when downstream code can consume it directly."""
        layers = e2e_scal.shape[0]
        n_cls, n_set, nt2 = self.n_cls, self.n_set, self.nt2
        se = e2e_scal.reshape(layers).astype(jnp.float32)
        sa = e2a_scal.reshape(layers).astype(jnp.float32)

        ccls = _choose_cls_block(n_cls, n_set, nt2, in_bytes=2, out_bytes=4,
                                 budget=_vmem_block_budget())
        grid = (n_cls // ccls, layers)   # layers innermost ("arbitrary")

        out = pl.pallas_call(
            _topo_kernel,
            out_shape=jax.ShapeDtypeStruct((n_cls, layers, n_set, nt2),
                                           jnp.float32),
            grid_spec=pltpu.PrefetchScalarGridSpec(
                num_scalar_prefetch=0,
                grid=grid,
                in_specs=[
                    pl.BlockSpec(memory_space=pltpu.MemorySpace.SMEM),   # se
                    pl.BlockSpec(memory_space=pltpu.MemorySpace.SMEM),   # sa
                    # Input block indices ignore the innermost layer axis, so
                    # each class block is DMA'd once and reused for all layers.
                    pl.BlockSpec((ccls, n_set, nt2), lambda m, l: (m, 0, 0)),
                    pl.BlockSpec((ccls, n_set, nt2), lambda m, l: (m, 0, 0)),
                ],
                out_specs=pl.BlockSpec((ccls, 1, n_set, nt2),
                                       lambda m, l: (m, l, 0, 0)),
            ),
            compiler_params=pltpu.CompilerParams(
                dimension_semantics=("parallel", "arbitrary"),
                vmem_limit_bytes=32 * 1024 * 1024),
            cost_estimate=pl.CostEstimate(
                flops=3 * layers * n_cls * n_set * nt2,
                transcendentals=0,
                bytes_accessed=(2 * n_cls * n_set * nt2 * 2       # bf16 inputs
                                + layers * n_cls * n_set * nt2 * 4  # f32 output
                                + 2 * layers * 4)),                # scalars
        )(se, sa, self._e2e, self._e2a)

        # Splitting the last dim of a contiguous array: free reshape.
        return out.reshape(n_cls, layers, n_set, self.nt, self.nt)

    def __call__(self, e2e_scal, e2a_scal):
        out = self.packed(e2e_scal, e2a_scal)
        # Class-major output -> per-class values are contiguous leading-axis
        # slices (one cheap pass; no non-leading-axis slice copies).
        return {c.replace('_', ' '): out[i]
                for i, c in enumerate(self.classnames)}


def _reference_forward(e2e_scal, e2a_scal, attns_e2e, attns_e2a, classnames):
    """Plain-JAX reference mirroring the PyTorch forward."""
    ref = {}
    se = e2e_scal.astype(jnp.float32)
    sa = e2a_scal.astype(jnp.float32)
    for c in classnames:
        ref[c.replace('_', ' ')] = (
            se * jnp.stack(attns_e2e[c]).astype(jnp.float32)
            + sa * jnp.stack(attns_e2a[c]).astype(jnp.float32))
    return ref


if __name__ == "__main__":
    # Small config consistent with the module: 4 classes, description_num
    # (n_set) = 4, CLIP context length = 77 tokens, 4 transformer layers.
    classnames = ["forest", "desert", "river", "glacier"]
    n_set = 4
    n_tokens = 77
    layers = 4

    key = jax.random.PRNGKey(0)
    k_se, k_sa, k_e2e, k_e2a = jax.random.split(key, 4)

    # The module initializes e2e_scal/e2a_scal as nn.Parameter(zeros); random
    # values are used here so the correctness check is non-trivial.
    e2e_scal = 0.1 * jax.random.normal(k_se, (layers, 1, 1, 1), dtype=jnp.float32)
    e2a_scal = 0.1 * jax.random.normal(k_sa, (layers, 1, 1, 1), dtype=jnp.float32)

    # __init__ builds these from clip.tokenize + topology parsing (host-side
    # Python); synthesize integer-count attention matrices of the same shape.
    def make_attns(k):
        d = {}
        for i, c in enumerate(classnames):
            kk = jax.random.fold_in(k, i)
            mats = jax.random.randint(kk, (n_set, n_tokens, n_tokens), 0, 3)
            d[c] = [mats[s].astype(jnp.float32) for s in range(n_set)]
        return d

    attns_e2e = make_attns(k_e2e)
    attns_e2a = make_attns(k_e2a)

    learner = TopoPromptLearnerPallas(classnames, attns_e2e, attns_e2a)
    out = learner(e2e_scal, e2a_scal)
    out = jax.block_until_ready(out)

    ref = _reference_forward(e2e_scal, e2a_scal, attns_e2e, attns_e2a,
                             classnames)
    assert set(out.keys()) == set(ref.keys())
    for name in classnames:
        key_name = name.replace('_', ' ')
        o, r = out[key_name], ref[key_name]
        assert o.shape == (layers, n_set, n_tokens, n_tokens), o.shape
        assert jnp.allclose(o, r, atol=1e-5, rtol=1e-5), (
            float(jnp.max(jnp.abs(o - r))))

    print("KERNEL_OK")
</pallas_src>

<mosaic_0001>
module attributes {stable_mosaic.version = 11 : i64} {
  func.func @_topo_kernel(%arg0: i32, %arg1: i32, %arg2: memref<4xf32, #tpu.memory_space<smem>>, %arg3: memref<4xf32, #tpu.memory_space<smem>>, %arg4: memref<4x4x5929xbf16, #tpu.memory_space<vmem>>, %arg5: memref<4x4x5929xbf16, #tpu.memory_space<vmem>>, %arg6: memref<4x1x4x5929xf32, #tpu.memory_space<vmem>>) attributes {dimension_semantics = [#tpu.dimension_semantics<parallel>, #tpu.dimension_semantics<arbitrary>], iteration_bounds = array<i64: 1, 4>, scalar_prefetch = 0 : i64, scratch_operands = 0 : i64, tpu.core_type = #tpu.core_type<tc>, window_params = [{transform_indices = @transform_0, window_bounds = array<i64: 4>}, {transform_indices = @transform_1, window_bounds = array<i64: 4>}, {transform_indices = @transform_2, window_bounds = array<i64: 4, 4, 5929>}, {transform_indices = @transform_3, window_bounds = array<i64: 4, 4, 5929>}, {transform_indices = @transform_4, window_bounds = array<i64: 4, 1, 4, 5929>}]} {
    %0 = arith.index_cast %arg1 : i32 to index
    %1 = memref.load %arg2[%0] : memref<4xf32, #tpu.memory_space<smem>>
    %2 = arith.index_cast %arg1 : i32 to index
    %3 = memref.load %arg3[%2] : memref<4xf32, #tpu.memory_space<smem>>
    %c0 = arith.constant 0 : index
    %c0_0 = arith.constant 0 : index
    %c0_1 = arith.constant 0 : index
    %4 = vector.load %arg4[%c0, %c0_0, %c0_1] : memref<4x4x5929xbf16, #tpu.memory_space<vmem>>, vector<4x4x5929xbf16>
    %5 = arith.extf %4 : vector<4x4x5929xbf16> to vector<4x4x5929xf32>
    %6 = vector.broadcast %1 : f32 to vector<4x4x5929xf32>
    %7 = arith.mulf %6, %5 : vector<4x4x5929xf32>
    %c0_2 = arith.constant 0 : index
    %c0_3 = arith.constant 0 : index
    %c0_4 = arith.constant 0 : index
    %8 = vector.load %arg5[%c0_2, %c0_3, %c0_4] : memref<4x4x5929xbf16, #tpu.memory_space<vmem>>, vector<4x4x5929xbf16>
    %9 = arith.extf %8 : vector<4x4x5929xbf16> to vector<4x4x5929xf32>
    %10 = vector.broadcast %3 : f32 to vector<4x4x5929xf32>
    %11 = arith.mulf %10, %9 : vector<4x4x5929xf32>
    %12 = arith.addf %7, %11 : vector<4x4x5929xf32>
    %13 = vector.shape_cast %12 : vector<4x4x5929xf32> to vector<4x1x4x5929xf32>
    %c0_5 = arith.constant 0 : index
    %c0_6 = arith.constant 0 : index
    %c0_7 = arith.constant 0 : index
    %c0_8 = arith.constant 0 : index
    %14 = vector.load %arg6[%c0_5, %c0_6, %c0_7, %c0_8] : memref<4x1x4x5929xf32, #tpu.memory_space<vmem>>, vector<4x1x4x5929xf32>
    tpu.vector_store %arg6[%c0_5, %c0_6, %c0_7, %c0_8], %13 {strides = array<i32>} : memref<4x1x4x5929xf32, #tpu.memory_space<vmem>>, vector<4x1x4x5929xf32>,
    return
  }
  func.func @transform_0(%arg0: i32, %arg1: i32) -> i32 {
    %c0_i32 = arith.constant 0 : i32
    %c0_i32_0 = arith.constant 0 : i32
    return %c0_i32 : i32
  }
  func.func @transform_1(%arg0: i32, %arg1: i32) -> i32 {
    %c0_i32 = arith.constant 0 : i32
    %c0_i32_0 = arith.constant 0 : i32
    return %c0_i32 : i32
  }
  func.func @transform_2(%arg0: i32, %arg1: i32) -> (i32, i32, i32) {
    %c0_i32 = arith.constant 0 : i32
    %c0_i32_0 = arith.constant 0 : i32
    %c0_i32_1 = arith.constant 0 : i32
    return %arg0, %c0_i32, %c0_i32_0 : i32, i32, i32
  }
  func.func @transform_3(%arg0: i32, %arg1: i32) -> (i32, i32, i32) {
    %c0_i32 = arith.constant 0 : i32
    %c0_i32_0 = arith.constant 0 : i32
    %c0_i32_1 = arith.constant 0 : i32
    return %arg0, %c0_i32, %c0_i32_0 : i32, i32, i32
  }
  func.func @transform_4(%arg0: i32, %arg1: i32) -> (i32, i32, i32, i32) {
    %c0_i32 = arith.constant 0 : i32
    %c0_i32_0 = arith.constant 0 : i32
    %c0_i32_1 = arith.constant 0 : i32
    return %arg0, %arg1, %c0_i32, %c0_i32_0 : i32, i32, i32, i32
  }
}

</mosaic_0001>

<llo_original>
// kernel: tpu_custom_call.1
$region0: #{tpu_custom_call.1}
  #allocation0 [shape = 'u32[]', space=smem, size = 0x4, offset = 0x4, fixed_abs, tag = 'smem constant byte address 0x4 - core index']
  #allocation1 [shape = 'u32[144,128]{1,0:T(1,128)}', space=vmem, size = 0x12000, scoped, tag = 'internal scratch']
  %s0 = inlined_call_operand.hbm [shape: f32[4], index: 0, kind: input, shape index: {}]
  %s1 = inlined_call_operand.hbm [shape: f32[4], index: 1, kind: input, shape index: {}]
  %s2 = inlined_call_operand.hbm [shape: bf16[4,4,5929], index: 2, kind: input, shape index: {}]
  %s3 = inlined_call_operand.hbm [shape: bf16[4,4,5929], index: 3, kind: input, shape index: {}]
  %s4 = inlined_call_operand.hbm [shape: f32[4,4,4,5929], index: 4, kind: output, shape index: {}]
  %s5 = sld [smem:[#allocation0]]
  $region65: #{tpu_custom_call.1} parent=0
    _
  %s7 = ssub.s32 1, %s5
  %s8 = scalar_select 0, %s7, %s5
  $region1: #{tpu_custom_call.1} parent=0
    #allocation2 [shape = 'u8[512]{0}', space=smem, size = 0x200, scoped, tag = 'input window, operand 0, single buffered']
    #allocation3 [shape = 's32[2]{0}', space=sflag, size = 0x8, scoped, tag = 'scoped memory for tpu_custom_call.1']
    #allocation4 [shape = 's32[2]{0}', space=sflag, size = 0x8, scoped, tag = 'scoped memory for tpu_custom_call.1']
    #allocation5 [shape = 's32[2]{0}', space=sflag, size = 0x8, scoped, tag = 'scoped memory for tpu_custom_call.1']
    #allocation6 [shape = 'u8[512]{0}', space=smem, size = 0x200, scoped, tag = 'input window, operand 1, single buffered']
    #allocation7 [shape = 's32[1]{0}', space=sflag, size = 0x4, scoped, tag = 'scoped memory for tpu_custom_call.1']
    #allocation8 [shape = 'u8[192512]{0}', space=vmem, size = 0x2f000, scoped, tag = 'input window, operand 2, single buffered']
    #allocation9 [shape = 'u8[192512]{0}', space=vmem, size = 0x2f000, scoped, tag = 'input window, operand 3, single buffered']
    #allocation10 [shape = 's32[1]{0}', space=sflag, size = 0x4, scoped, tag = 'scoped memory for tpu_custom_call.1']
    #allocation11 [shape = 'u8[770048]{0}', space=vmem, size = 0xbc000, scoped, tag = 'output window, operand 0']
    %9 = vsyncpa [#allocation5], 0
    %10 = vsyncpa [#allocation7], 0
    %11 = vsyncpa [#allocation3], 0
    %12 = vsyncpa [#allocation10], 0
    %13 = vsyncpa [#allocation4], 0
    %s14 = scalar_lea.sflag [#allocation4], 1
    %15 = vsyncpa %s14, 0
    loop: start=0, step=1, limit=6
    $region2: #{tpu_custom_call.1} parent=1 // loop_pre_header
      _
    $region3: #{tpu_custom_call.1} parent=1 // loop_header
      %s17 = sphi 0, %s21
      %p18 = scmp.ge.s32.totalorder %s17, 6
      %s24 = sphi 0, %s36
      %s25 = sphi 0, %s32
      %s26 = sphi 0, %s24
      %s27 = sphi 0, %s25
      %s28 = sphi 0, %s26
      %s29 = sphi 0, %s27
      %s37 = sphi 0, %s37
      %s39 = sphi 0, %s37
      %s40 = sphi 0, %s39
      %s54 = sphi 0, %s40
      %s58 = sphi 0, %s58
      %s60 = sphi 0, %s58
      %s61 = sphi 0, %s60
      %s75 = sphi 0, %s61
      %s81 = sphi 0, %s83
      %s84 = sphi 0, %s81
      %s85 = sphi 0, %s84
      %s101 = sphi 0, %s85
      %s107 = sphi 0, %s109
      %s110 = sphi 0, %s107
      %s111 = sphi 0, %s110
      %s127 = sphi 0, %s111
      %s135 = sphi 0, %s137
      %s138 = sphi 0, %s135
      %s139 = sphi 0, %s138
      %s155 = sphi 0, %s139
    $region4: #{tpu_custom_call.1} parent=1 // loop_header_branch
      %20 = sbr.rel (%p18) target = $region8
    $region5: #{tpu_custom_call.1} parent=1 // loop_body
      %s22 = ssub.s32 %s17, 1
      %s23 = ssub.s32 %s17, 2
      %s30 = sadd.s32 1, %s25
      %p31 = scmp.ge.s32.totalorder %s30, 4
      %s32 = scalar_select %p31, 0, %s30
      %s33 = sadd.s32 1, %s24
      %s34 = scalar_select %p31, %s33, %s24
      %p35 = scmp.ge.s32.totalorder %s34, 1
      %s36 = scalar_select %p35, 0, %s34
      %s38 = sadd.s32 %s37, 1
      %p41 = scmp.eq.s32.totalorder %s17, 3
      %p42 = scmp.ne.s32.totalorder %s37, %s39
      %p43 = scmp.eq.s32.totalorder %s17, 0
      %p44 = por %p42, %p43
      %p45 = scmp.ne.s32.totalorder %s37, %s39
      %p46 = scmp.eq.s32.totalorder %s22, 3
      %p47 = por %p45, %p46
      %p48 = scmp.ne.s32.totalorder %s39, %s40
      %p49 = scmp.eq.s32.totalorder %s22, 0
      %p50 = por %p48, %p49
      %p51 = scmp.ne.s32.totalorder %s39, %s40
      %p52 = scmp.eq.s32.totalorder %s23, 3
      %p53 = por %p51, %p52
      %p55 = scmp.ne.s32.totalorder %s40, %s54
      %p56 = scmp.eq.s32.totalorder %s23, 0
      %p57 = por %p55, %p56
      %s59 = sadd.s32 %s58, 1
      %p62 = scmp.eq.s32.totalorder %s17, 3
      %p63 = scmp.ne.s32.totalorder %s58, %s60
      %p64 = scmp.eq.s32.totalorder %s17, 0
      %p65 = por %p63, %p64
      %p66 = scmp.ne.s32.totalorder %s58, %s60
      %p67 = scmp.eq.s32.totalorder %s22, 3
      %p68 = por %p66, %p67
      %p69 = scmp.ne.s32.totalorder %s60, %s61
      %p70 = scmp.eq.s32.totalorder %s22, 0
      %p71 = por %p69, %p70
      %p72 = scmp.ne.s32.totalorder %s60, %s61
      %p73 = scmp.eq.s32.totalorder %s23, 3
      %p74 = por %p72, %p73
      %p76 = scmp.ne.s32.totalorder %s61, %s75
      %p77 = scmp.eq.s32.totalorder %s23, 0
      %p78 = por %p76, %p77
      %s79 = ssub.s32 %s24, %s36
      %p80 = scmp.eq.s32.totalorder %s79, 0
      %s82 = sadd.s32 %s81, 1
      %s83 = scalar_select %p80, %s81, %s82
      %p86 = pneg %p80
      %p87 = scmp.eq.s32.totalorder %s17, 3
      %p88 = por %p86, %p87
      %p89 = scmp.ne.s32.totalorder %s81, %s84
      %p90 = scmp.eq.s32.totalorder %s17, 0
      %p91 = por %p89, %p90
      %p92 = scmp.ne.s32.totalorder %s81, %s84
      %p93 = scmp.eq.s32.totalorder %s22, 3
      %p94 = por %p92, %p93
      %p95 = scmp.ne.s32.totalorder %s84, %s85
      %p96 = scmp.eq.s32.totalorder %s22, 0
      %p97 = por %p95, %p96
      %p98 = scmp.ne.s32.totalorder %s84, %s85
      %p99 = scmp.eq.s32.totalorder %s23, 3
      %p100 = por %p98, %p99
      %p102 = scmp.ne.s32.totalorder %s85, %s101
      %p103 = scmp.eq.s32.totalorder %s23, 0
      %p104 = por %p102, %p103
      %s105 = ssub.s32 %s24, %s36
      %p106 = scmp.eq.s32.totalorder %s105, 0
      %s108 = sadd.s32 %s107, 1
      %s109 = scalar_select %p106, %s107, %s108
      %p112 = pneg %p106
      %p113 = scmp.eq.s32.totalorder %s17, 3
      %p114 = por %p112, %p113
      %p115 = scmp.ne.s32.totalorder %s107, %s110
      %p116 = scmp.eq.s32.totalorder %s17, 0
      %p117 = por %p115, %p116
      %p118 = scmp.ne.s32.totalorder %s107, %s110
      %p119 = scmp.eq.s32.totalorder %s22, 3
      %p120 = por %p118, %p119
      %p121 = scmp.ne.s32.totalorder %s110, %s111
      %p122 = scmp.eq.s32.totalorder %s22, 0
      %p123 = por %p121, %p122
      %p124 = scmp.ne.s32.totalorder %s110, %s111
      %p125 = scmp.eq.s32.totalorder %s23, 3
      %p126 = por %p124, %p125
      %p128 = scmp.ne.s32.totalorder %s111, %s127
      %p129 = scmp.eq.s32.totalorder %s23, 0
      %p130 = por %p128, %p129
      %s131 = ssub.s32 %s24, %s36
      %s132 = ssub.s32 %s25, %s32
      %s133 = sor.u32 %s131, %s132
      %p134 = scmp.eq.s32.totalorder %s133, 0
      %s136 = sadd.s32 %s135, 1
      %s137 = scalar_select %p134, %s135, %s136
      %p140 = pneg %p134
      %p141 = scmp.eq.s32.totalorder %s17, 3
      %p142 = por %p140, %p141
      %p143 = scmp.ne.s32.totalorder %s135, %s138
      %p144 = scmp.eq.s32.totalorder %s17, 0
      %p145 = por %p143, %p144
      %p146 = scmp.ne.s32.totalorder %s135, %s138
      %p147 = scmp.eq.s32.totalorder %s22, 3
      %p148 = por %p146, %p147
      %p149 = scmp.ne.s32.totalorder %s138, %s139
      %p150 = scmp.eq.s32.totalorder %s22, 0
      %p151 = por %p149, %p150
      %p152 = scmp.ne.s32.totalorder %s138, %s139
      %p153 = scmp.eq.s32.totalorder %s23, 3
      %p154 = por %p152, %p153
      %p156 = scmp.ne.s32.totalorder %s139, %s155
      %p157 = scmp.eq.s32.totalorder %s23, 0
      %p158 = por %p156, %p157
      %p159 = scmp.le.s32.totalorder 1, %s17
      %p160 = scmp.lt.s32.totalorder %s17, 5
      %p161 = pnand %p159, %p160
      %p162 = pneg %p161
      // Predicated region
      $region9: #{tpu_custom_call.1} parent=5 // pred_check
        _
      $region10: #{tpu_custom_call.1} parent=5 // pred_check_branch
        %164 = sbr.rel (%p161) target = $region12
      $region11: #{tpu_custom_call.1} parent=5 // pred_region
        %s165 = ssub.s32 %s17, 1
        // Predicated region
        $region13: #{tpu_custom_call.1} parent=11 // pred_check
          %p166 = pneg %p50
        $region14: #{tpu_custom_call.1} parent=11 // pred_check_branch
          %168 = sbr.rel (%p166) target = $region16
        $region15: #{tpu_custom_call.1} parent=11 // pred_region
          %s170 = ssub.s32 16, 16
          %171 = vsyncadd [#allocation5], %s170
          %174 = dma.hbm_to_smem %s0, 16, [#allocation2], [#allocation5]
        $region16: #{tpu_custom_call.1} parent=11 // pred_fallthru
          _
        // Predicated region
        $region17: #{tpu_custom_call.1} parent=11 // pred_check
          %p175 = pneg %p71
        $region18: #{tpu_custom_call.1} parent=11 // pred_check_branch
          %177 = sbr.rel (%p175) target = $region20
        $region19: #{tpu_custom_call.1} parent=11 // pred_region
          %s179 = ssub.s32 16, 16
          %180 = vsyncadd [#allocation7], %s179
          %183 = dma.hbm_to_smem %s1, 16, [#allocation6], [#allocation7]
        $region20: #{tpu_custom_call.1} parent=11 // pred_fallthru
          _
        // Predicated region
        $region21: #{tpu_custom_call.1} parent=11 // pred_check
          %p184 = pneg %p97
        $region22: #{tpu_custom_call.1} parent=11 // pred_check_branch
          %186 = sbr.rel (%p184) target = $region24
        $region23: #{tpu_custom_call.1} parent=11 // pred_region
          %s187 = smul.u32 4, %s26
          %s189 = ssub.s32 6016, 6016
          %190 = vsyncadd [#allocation3], %s189
          %s191 = smul.addr %s187, 47
          %s192 = smul.addr %s191, 32
          %s193 = scalar_lea.hbm %s2, %s192
          %s194 = sshll.u32 [#allocation8], 4
          %s195 = int_to_ptr.vmem [resolvable:$true] %s194
          %200 = dma.hbm_to_vmem [thread:$0]  %s193, 6016, %s195, [#allocation3], 1504, 1504, 94
        $region24: #{tpu_custom_call.1} parent=11 // pred_fallthru
          _
        // Predicated region
        $region25: #{tpu_custom_call.1} parent=11 // pred_check
          %p201 = pneg %p123
        $region26: #{tpu_custom_call.1} parent=11 // pred_check_branch
          %203 = sbr.rel (%p201) target = $region28
        $region27: #{tpu_custom_call.1} parent=11 // pred_region
          %s204 = smul.u32 4, %s26
          %s206 = ssub.s32 6016, 6016
          %207 = vsyncadd [#allocation10], %s206
          %s208 = smul.addr %s204, 47
          %s209 = smul.addr %s208, 32
          %s210 = scalar_lea.hbm %s3, %s209
          %s211 = sshll.u32 [#allocation9], 4
          %s212 = int_to_ptr.vmem [resolvable:$true] %s211
          %217 = dma.hbm_to_vmem [thread:$0]  %s210, 6016, %s212, [#allocation10], 1504, 1504, 94
        $region28: #{tpu_custom_call.1} parent=11 // pred_fallthru
          _
      $region12: #{tpu_custom_call.1} parent=5 // pred_fallthru
        _
      %p218 = scmp.lt.s32.totalorder %s17, 4
      // Predicated region
      $region29: #{tpu_custom_call.1} parent=5 // pred_check
        %p219 = pneg %p218
      $region30: #{tpu_custom_call.1} parent=5 // pred_check_branch
        %221 = sbr.rel (%p219) target = $region32
      $region31: #{tpu_custom_call.1} parent=5 // pred_region
        _
      $region32: #{tpu_custom_call.1} parent=5 // pred_fallthru
        _
      %p222 = scmp.le.s32.totalorder 1, %s17
      %p223 = scmp.lt.s32.totalorder %s17, 5
      %p224 = pnand %p222, %p223
      %p225 = pneg %p224
      // Predicated region
      $region33: #{tpu_custom_call.1} parent=5 // pred_check
        _
      $region34: #{tpu_custom_call.1} parent=5 // pred_check_branch
        %227 = sbr.rel (%p224) target = $region36
      $region35: #{tpu_custom_call.1} parent=5 // pred_region
        %s228 = ssub.s32 %s17, 1
        // Predicated region
        $region37: #{tpu_custom_call.1} parent=35 // pred_check
          %p229 = pneg %p50
        $region38: #{tpu_custom_call.1} parent=35 // pred_check_branch
          %231 = sbr.rel (%p229) target = $region40
        $region39: #{tpu_custom_call.1} parent=35 // pred_region
          %232 = dma.done [#allocation5], 16
        $region40: #{tpu_custom_call.1} parent=35 // pred_fallthru
          _
        // Predicated region
        $region41: #{tpu_custom_call.1} parent=35 // pred_check
          %p233 = pneg %p71
        $region42: #{tpu_custom_call.1} parent=35 // pred_check_branch
          %235 = sbr.rel (%p233) target = $region44
        $region43: #{tpu_custom_call.1} parent=35 // pred_region
          %236 = dma.done [#allocation7], 16
        $region44: #{tpu_custom_call.1} parent=35 // pred_fallthru
          _
        // Predicated region
        $region45: #{tpu_custom_call.1} parent=35 // pred_check
          %p237 = pneg %p97
        $region46: #{tpu_custom_call.1} parent=35 // pred_check_branch
          %239 = sbr.rel (%p237) target = $region48
        $region47: #{tpu_custom_call.1} parent=35 // pred_region
          %240 = dma.done [#allocation3], 6016
        $region48: #{tpu_custom_call.1} parent=35 // pred_fallthru
          _
        // Predicated region
        $region49: #{tpu_custom_call.1} parent=35 // pred_check
          %p241 = pneg %p123
        $region50: #{tpu_custom_call.1} parent=35 // pred_check_branch
          %243 = sbr.rel (%p241) target = $region52
        $region51: #{tpu_custom_call.1} parent=35 // pred_region
          %244 = dma.done [#allocation10], 6016
        $region52: #{tpu_custom_call.1} parent=35 // pred_fallthru
          _
        %245 = sfence
        %p246 = pneg %p50
        %p247 = pneg %p47
        %p248 = pneg %p71
        %p249 = pneg %p68
        %p250 = pneg %p97
        %p251 = pneg %p94
        %p252 = pneg %p123
        %p253 = pneg %p120
        %p254 = pneg %p151
        %p255 = pneg %p148
        %s256 = sand.u32 %s138, 1
        %s257 = scalar_lea.sflag [#allocation4], %s256
        %s258 = sand.u32 %s138, 1
        %s259 = smul.addr %s258, 752
        %s260 = scalar_lea.vmem [#allocation11], %s259
        %s261 = smul.u32 4, %s26
        %s262 = smul.u32 4, %s26
        %s263 = smul.u32 4, %s26
        %s264 = sld [smem:[#allocation2 + %s27]]
        %s265 = sld [smem:[#allocation6 + %s27]]
        %v266 = vld [vmem:[#allocation8] sm:$0xff]
        %v267 = vld [vmem:[#allocation8 + $0x8] sm:$0xff]
        %v268 = vld [vmem:[#allocation8 + $0x10] sm:$0xff]
        %v269 = vld [vmem:[#allocation8 + $0x18] sm:$0xff]
        %v270 = vld [vmem:[#allocation8 + $0x20] sm:$0xff]
        %v271 = vld [vmem:[#allocation8 + $0x28] sm:$0xff]
        %v272 = vld [vmem:[#allocation8 + $0x30] sm:$0xff]
        %v273 = vld [vmem:[#allocation8 + $0x38] sm:$0xff]
        %v274 = vld [vmem:[#allocation8 + $0x40] sm:$0xff]
        %v275 = vld [vmem:[#allocation8 + $0x48] sm:$0xff]
        %v276 = vld [vmem:[#allocation8 + $0x50] sm:$0xff]
        %v277 = vld [vmem:[#allocation8 + $0x58] sm:$0x3f]
        %v278 = vld [vmem:[#allocation8 + $0x5e] sm:$0xff]
        %v279 = vld [vmem:[#allocation8 + $0x66] sm:$0xff]
        %v280 = vld [vmem:[#allocation8 + $0x6e] sm:$0xff]
        %v281 = vld [vmem:[#allocation8 + $0x76] sm:$0xff]
        %v282 = vld [vmem:[#allocation8 + $0x7e] sm:$0xff]
        %v283 = vld [vmem:[#allocation8 + $0x86] sm:$0xff]
        %v284 = vld [vmem:[#allocation8 + $0x8e] sm:$0xff]
        %v285 = vld [vmem:[#allocation8 + $0x96] sm:$0xff]
        %v286 = vld [vmem:[#allocation8 + $0x9e] sm:$0xff]
        %v287 = vld [vmem:[#allocation8 + $0xa6] sm:$0xff]
        %v288 = vld [vmem:[#allocation8 + $0xae] sm:$0xff]
        %v289 = vld [vmem:[#allocation8 + $0xb6] sm:$0x3f]
        %v290 = vld [vmem:[#allocation8 + $0xbc] sm:$0xff]
        %v291 = vld [vmem:[#allocation8 + $0xc4] sm:$0xff]
        %v292 = vld [vmem:[#allocation8 + $0xcc] sm:$0xff]
        %v293 = vld [vmem:[#allocation8 + $0xd4] sm:$0xff]
        %v294 = vld [vmem:[#allocation8 + $0xdc] sm:$0xff]
        %v295 = vld [vmem:[#allocation8 + $0xe4] sm:$0xff]
        %v296 = vld [vmem:[#allocation8 + $0xec] sm:$0xff]
        %v297 = vld [vmem:[#allocation8 + $0xf4] sm:$0xff]
        %v298 = vld [vmem:[#allocation8 + $0xfc] sm:$0xff]
        %v299 = vld [vmem:[#allocation8 + $0x104] sm:$0xff]
        %v300 = vld [vmem:[#allocation8 + $0x10c] sm:$0xff]
        %v301 = vld [vmem:[#allocation8 + $0x114] sm:$0x3f]
        %v302 = vld [vmem:[#allocation8 + $0x11a] sm:$0xff]
        %v303 = vld [vmem:[#allocation8 + $0x122] sm:$0xff]
        %v304 = vld [vmem:[#allocation8 + $0x12a] sm:$0xff]
        %v305 = vld [vmem:[#allocation8 + $0x132] sm:$0xff]
        %v306 = vld [vmem:[#allocation8 + $0x13a] sm:$0xff]
        %v307 = vld [vmem:[#allocation8 + $0x142] sm:$0xff]
        %v308 = vld [vmem:[#allocation8 + $0x14a] sm:$0xff]
        %v309 = vld [vmem:[#allocation8 + $0x152] sm:$0xff]
        %v310 = vld [vmem:[#allocation8 + $0x15a] sm:$0xff]
        %v311 = vld [vmem:[#allocation8 + $0x162] sm:$0xff]
        %v312 = vld [vmem:[#allocation8 + $0x16a] sm:$0xff]
        %v313 = vld [vmem:[#allocation8 + $0x172] sm:$0x3f]
        %v314 = vunpack.c.l.bf16 %v266
        %v315 = vunpack.c.h.bf16 %v266
        %v316 = vunpack.c.l.bf16 %v267
        %v317 = vunpack.c.h.bf16 %v267
        %v318 = vunpack.c.l.bf16 %v268
        %v319 = vunpack.c.h.bf16 %v268
        %v320 = vunpack.c.l.bf16 %v269
        %v321 = vunpack.c.h.bf16 %v269
        %v322 = vunpack.c.l.bf16 %v270
        %v323 = vunpack.c.h.bf16 %v270
        %v324 = vunpack.c.l.bf16 %v271
        %v325 = vunpack.c.h.bf16 %v271
        %v326 = vunpack.c.l.bf16 %v272
        %v327 = vunpack.c.h.bf16 %v272
        %v328 = vunpack.c.l.bf16 %v273
        %v329 = vunpack.c.h.bf16 %v273
        %v330 = vunpack.c.l.bf16 %v274
        %v331 = vunpack.c.h.bf16 %v274
        %v332 = vunpack.c.l.bf16 %v275
        %v333 = vunpack.c.h.bf16 %v275
        %v334 = vunpack.c.l.bf16 %v276
        %v335 = vunpack.c.h.bf16 %v276
        %v336 = vunpack.c.l.bf16 %v277
        %v337 = vunpack.c.h.bf16 %v277
        %v338 = vunpack.c.l.bf16 %v278
        %v339 = vunpack.c.h.bf16 %v278
        %v340 = vunpack.c.l.bf16 %v279
        %v341 = vunpack.c.h.bf16 %v279
        %v342 = vunpack.c.l.bf16 %v280
        %v343 = vunpack.c.h.bf16 %v280
        %v344 = vunpack.c.l.bf16 %v281
        %v345 = vunpack.c.h.bf16 %v281
        %v346 = vunpack.c.l.bf16 %v282
        %v347 = vunpack.c.h.bf16 %v282
        %v348 = vunpack.c.l.bf16 %v283
        %v349 = vunpack.c.h.bf16 %v283
        %v350 = vunpack.c.l.bf16 %v284
        %v351 = vunpack.c.h.bf16 %v284
        %v352 = vunpack.c.l.bf16 %v285
        %v353 = vunpack.c.h.bf16 %v285
        %v354 = vunpack.c.l.bf16 %v286
        %v355 = vunpack.c.h.bf16 %v286
        %v356 = vunpack.c.l.bf16 %v287
        %v357 = vunpack.c.h.bf16 %v287
        %v358 = vunpack.c.l.bf16 %v288
        %v359 = vunpack.c.h.bf16 %v288
        %v360 = vunpack.c.l.bf16 %v289
        %v361 = vunpack.c.h.bf16 %v289
        %v362 = vunpack.c.l.bf16 %v290
        %v363 = vunpack.c.h.bf16 %v290
        %v364 = vunpack.c.l.bf16 %v291
        %v365 = vunpack.c.h.bf16 %v291
        %v366 = vunpack.c.l.bf16 %v292
        %v367 = vunpack.c.h.bf16 %v292
        %v368 = vunpack.c.l.bf16 %v293
        %v369 = vunpack.c.h.bf16 %v293
        %v370 = vunpack.c.l.bf16 %v294
        %v371 = vunpack.c.h.bf16 %v294
        %v372 = vunpack.c.l.bf16 %v295
        %v373 = vunpack.c.h.bf16 %v295
        %v374 = vunpack.c.l.bf16 %v296
        %v375 = vunpack.c.h.bf16 %v296
        %v376 = vunpack.c.l.bf16 %v297
        %v377 = vunpack.c.h.bf16 %v297
        %v378 = vunpack.c.l.bf16 %v298
        %v379 = vunpack.c.h.bf16 %v298
        %v380 = vunpack.c.l.bf16 %v299
        %v381 = vunpack.c.h.bf16 %v299
        %v382 = vunpack.c.l.bf16 %v300
        %v383 = vunpack.c.h.bf16 %v300
        %v384 = vunpack.c.l.bf16 %v301
        %v385 = vunpack.c.h.bf16 %v301
        %v386 = vunpack.c.l.bf16 %v302
        %v387 = vunpack.c.h.bf16 %v302
        %v388 = vunpack.c.l.bf16 %v303
        %v389 = vunpack.c.h.bf16 %v303
        %v390 = vunpack.c.l.bf16 %v304
        %v391 = vunpack.c.h.bf16 %v304
        %v392 = vunpack.c.l.bf16 %v305
        %v393 = vunpack.c.h.bf16 %v305
        %v394 = vunpack.c.l.bf16 %v306
        %v395 = vunpack.c.h.bf16 %v306
        %v396 = vunpack.c.l.bf16 %v307
        %v397 = vunpack.c.h.bf16 %v307
        %v398 = vunpack.c.l.bf16 %v308
        %v399 = vunpack.c.h.bf16 %v308
        %v400 = vunpack.c.l.bf16 %v309
        %v401 = vunpack.c.h.bf16 %v309
        %v402 = vunpack.c.l.bf16 %v310
        %v403 = vunpack.c.h.bf16 %v310
        %v404 = vunpack.c.l.bf16 %v311
        %v405 = vunpack.c.h.bf16 %v311
        %v406 = vunpack.c.l.bf16 %v312
        %v407 = vunpack.c.h.bf16 %v312
        %v408 = vunpack.c.l.bf16 %v313
        %v409 = vunpack.c.h.bf16 %v313
        %v410 = vstv %s264
        %v411 = vmul.f32 %v410, %v314
        %v412 = vmul.f32 %v410, %v315
        %v413 = vmul.f32 %v410, %v316
        %v414 = vmul.f32 %v410, %v317
        %v415 = vmul.f32 %v410, %v318
        %v416 = vmul.f32 %v410, %v319
        %v417 = vmul.f32 %v410, %v320
        %v418 = vmul.f32 %v410, %v321
        %v419 = vmul.f32 %v410, %v322
        %v420 = vmul.f32 %v410, %v323
        %v421 = vmul.f32 %v410, %v324
        %v422 = vmul.f32 %v410, %v325
        %v423 = vmul.f32 %v410, %v326
        %v424 = vmul.f32 %v410, %v327
        %v425 = vmul.f32 %v410, %v328
        %v426 = vmul.f32 %v410, %v329
        %v427 = vmul.f32 %v410, %v330
        %v428 = vmul.f32 %v410, %v331
        %v429 = vmul.f32 %v410, %v332
        %v430 = vmul.f32 %v410, %v333
        %v431 = vmul.f32 %v410, %v334
        %v432 = vmul.f32 %v410, %v335
        %v433 = vmul.f32 %v410, %v336
        %v434 = vmul.f32 %v410, %v337
        %v435 = vmul.f32 %v410, %v338
        %v436 = vmul.f32 %v410, %v339
        %v437 = vmul.f32 %v410, %v340
        %v438 = vmul.f32 %v410, %v341
        %v439 = vmul.f32 %v410, %v342
        %v440 = vmul.f32 %v410, %v343
        %v441 = vmul.f32 %v410, %v344
        %v442 = vmul.f32 %v410, %v345
        %v443 = vmul.f32 %v410, %v346
        %v444 = vmul.f32 %v410, %v347
        %v445 = vmul.f32 %v410, %v348
        %v446 = vmul.f32 %v410, %v349
        %v447 = vmul.f32 %v410, %v350
        %v448 = vmul.f32 %v410, %v351
        %v449 = vmul.f32 %v410, %v352
        %v450 = vmul.f32 %v410, %v353
        %v451 = vmul.f32 %v410, %v354
        %v452 = vmul.f32 %v410, %v355
        %v453 = vmul.f32 %v410, %v356
        %v454 = vmul.f32 %v410, %v357
        %v455 = vmul.f32 %v410, %v358
        %v456 = vmul.f32 %v410, %v359
        %v457 = vmul.f32 %v410, %v360
        %v458 = vmul.f32 %v410, %v361
        %v459 = vmul.f32 %v410, %v362
        %v460 = vmul.f32 %v410, %v363
        %v461 = vmul.f32 %v410, %v364
        %v462 = vmul.f32 %v410, %v365
        %v463 = vmul.f32 %v410, %v366
        %v464 = vmul.f32 %v410, %v367
        %v465 = vmul.f32 %v410, %v368
        %v466 = vmul.f32 %v410, %v369
        %v467 = vmul.f32 %v410, %v370
        %v468 = vmul.f32 %v410, %v371
        %v469 = vmul.f32 %v410, %v372
        %v470 = vmul.f32 %v410, %v373
        %v471 = vmul.f32 %v410, %v374
        %v472 = vmul.f32 %v410, %v375
        %v473 = vmul.f32 %v410, %v376
        %v474 = vmul.f32 %v410, %v377
        %v475 = vmul.f32 %v410, %v378
        %v476 = vmul.f32 %v410, %v379
        %v477 = vmul.f32 %v410, %v380
        %v478 = vmul.f32 %v410, %v381
        %v479 = vmul.f32 %v410, %v382
        %v480 = vmul.f32 %v410, %v383
        %v481 = vmul.f32 %v410, %v384
        %v482 = vmul.f32 %v410, %v385
        %v483 = vmul.f32 %v410, %v386
        %v484 = vmul.f32 %v410, %v387
        %v485 = vmul.f32 %v410, %v388
        %v486 = vmul.f32 %v410, %v389
        %v487 = vmul.f32 %v410, %v390
        %v488 = vmul.f32 %v410, %v391
        %v489 = vmul.f32 %v410, %v392
        %v490 = vmul.f32 %v410, %v393
        %v491 = vmul.f32 %v410, %v394
        %v492 = vmul.f32 %v410, %v395
        %v493 = vmul.f32 %v410, %v396
        %v494 = vmul.f32 %v410, %v397
        %v495 = vmul.f32 %v410, %v398
        %v496 = vmul.f32 %v410, %v399
        %v497 = vmul.f32 %v410, %v400
        %v498 = vmul.f32 %v410, %v401
        %v499 = vmul.f32 %v410, %v402
        %v500 = vmul.f32 %v410, %v403
        %v501 = vmul.f32 %v410, %v404
        %v502 = vmul.f32 %v410, %v405
        %v503 = vmul.f32 %v410, %v406
        %v504 = vmul.f32 %v410, %v407
        %v505 = vmul.f32 %v410, %v408
        %v506 = vmul.f32 %v410, %v409
        %v507 = vld [vmem:[#allocation9] sm:$0xff]
        %v508 = vld [vmem:[#allocation9 + $0x8] sm:$0xff]
        %v509 = vld [vmem:[#allocation9 + $0x10] sm:$0xff]
        %v510 = vld [vmem:[#allocation9 + $0x18] sm:$0xff]
        %v511 = vld [vmem:[#allocation9 + $0x20] sm:$0xff]
        %v512 = vld [vmem:[#allocation9 + $0x28] sm:$0xff]
        %v513 = vld [vmem:[#allocation9 + $0x30] sm:$0xff]
        %v514 = vld [vmem:[#allocation9 + $0x38] sm:$0xff]
        %v515 = vld [vmem:[#allocation9 + $0x40] sm:$0xff]
        %v516 = vld [vmem:[#allocation9 + $0x48] sm:$0xff]
        %v517 = vld [vmem:[#allocation9 + $0x50] sm:$0xff]
        %v518 = vld [vmem:[#allocation9 + $0x58] sm:$0x3f]
        %v519 = vld [vmem:[#allocation9 + $0x5e] sm:$0xff]
        %v520 = vld [vmem:[#allocation9 + $0x66] sm:$0xff]
        %v521 = vld [vmem:[#allocation9 + $0x6e] sm:$0xff]
        %v522 = vld [vmem:[#allocation9 + $0x76] sm:$0xff]
        %v523 = vld [vmem:[#allocation9 + $0x7e] sm:$0xff]
        %v524 = vld [vmem:[#allocation9 + $0x86] sm:$0xff]
        %v525 = vld [vmem:[#allocation9 + $0x8e] sm:$0xff]
        %v526 = vld [vmem:[#allocation9 + $0x96] sm:$0xff]
        %v527 = vld [vmem:[#allocation9 + $0x9e] sm:$0xff]
        %v528 = vld [vmem:[#allocation9 + $0xa6] sm:$0xff]
        %v529 = vld [vmem:[#allocation9 + $0xae] sm:$0xff]
        %v530 = vld [vmem:[#allocation9 + $0xb6] sm:$0x3f]
        %v531 = vld [vmem:[#allocation9 + $0xbc] sm:$0xff]
        %v532 = vld [vmem:[#allocation9 + $0xc4] sm:$0xff]
        %v533 = vld [vmem:[#allocation9 + $0xcc] sm:$0xff]
        %v534 = vld [vmem:[#allocation9 + $0xd4] sm:$0xff]
        %v535 = vld [vmem:[#allocation9 + $0xdc] sm:$0xff]
        %v536 = vld [vmem:[#allocation9 + $0xe4] sm:$0xff]
        %v537 = vld [vmem:[#allocation9 + $0xec] sm:$0xff]
        %v538 = vld [vmem:[#allocation9 + $0xf4] sm:$0xff]
        %v539 = vld [vmem:[#allocation9 + $0xfc] sm:$0xff]
        %v540 = vld [vmem:[#allocation9 + $0x104] sm:$0xff]
        %v541 = vld [vmem:[#allocation9 + $0x10c] sm:$0xff]
        %v542 = vld [vmem:[#allocation9 + $0x114] sm:$0x3f]
        %v543 = vld [vmem:[#allocation9 + $0x11a] sm:$0xff]
        %v544 = vld [vmem:[#allocation9 + $0x122] sm:$0xff]
        %v545 = vld [vmem:[#allocation9 + $0x12a] sm:$0xff]
        %v546 = vld [vmem:[#allocation9 + $0x132] sm:$0xff]
        %v547 = vld [vmem:[#allocation9 + $0x13a] sm:$0xff]
        %v548 = vld [vmem:[#allocation9 + $0x142] sm:$0xff]
        %v549 = vld [vmem:[#allocation9 + $0x14a] sm:$0xff]
        %v550 = vld [vmem:[#allocation9 + $0x152] sm:$0xff]
        %v551 = vld [vmem:[#allocation9 + $0x15a] sm:$0xff]
        %v552 = vld [vmem:[#allocation9 + $0x162] sm:$0xff]
        %v553 = vld [vmem:[#allocation9 + $0x16a] sm:$0xff]
        %v554 = vld [vmem:[#allocation9 + $0x172] sm:$0x3f]
        %v555 = vunpack.c.l.bf16 %v507
        %v556 = vunpack.c.h.bf16 %v507
        %v557 = vunpack.c.l.bf16 %v508
        %v558 = vunpack.c.h.bf16 %v508
        %v559 = vunpack.c.l.bf16 %v509
        %v560 = vunpack.c.h.bf16 %v509
        %v561 = vunpack.c.l.bf16 %v510
        %v562 = vunpack.c.h.bf16 %v510
        %v563 = vunpack.c.l.bf16 %v511
        %v564 = vunpack.c.h.bf16 %v511
        %v565 = vunpack.c.l.bf16 %v512
        %v566 = vunpack.c.h.bf16 %v512
        %v567 = vunpack.c.l.bf16 %v513
        %v568 = vunpack.c.h.bf16 %v513
        %v569 = vunpack.c.l.bf16 %v514
        %v570 = vunpack.c.h.bf16 %v514
        %v571 = vunpack.c.l.bf16 %v515
        %v572 = vunpack.c.h.bf16 %v515
        %v573 = vunpack.c.l.bf16 %v516
        %v574 = vunpack.c.h.bf16 %v516
        %v575 = vunpack.c.l.bf16 %v517
        %v576 = vunpack.c.h.bf16 %v517
        %v577 = vunpack.c.l.bf16 %v518
        %v578 = vunpack.c.h.bf16 %v518
        %v579 = vunpack.c.l.bf16 %v519
        %v580 = vunpack.c.h.bf16 %v519
        %v581 = vunpack.c.l.bf16 %v520
        %v582 = vunpack.c.h.bf16 %v520
        %v583 = vunpack.c.l.bf16 %v521
        %v584 = vunpack.c.h.bf16 %v521
        %v585 = vunpack.c.l.bf16 %v522
        %v586 = vunpack.c.h.bf16 %v522
        %v587 = vunpack.c.l.bf16 %v523
        %v588 = vunpack.c.h.bf16 %v523
        %v589 = vunpack.c.l.bf16 %v524
        %v590 = vunpack.c.h.bf16 %v524
        %v591 = vunpack.c.l.bf16 %v525
        %v592 = vunpack.c.h.bf16 %v525
        %v593 = vunpack.c.l.bf16 %v526
        %v594 = vunpack.c.h.bf16 %v526
        %v595 = vunpack.c.l.bf16 %v527
        %v596 = vunpack.c.h.bf16 %v527
        %v597 = vunpack.c.l.bf16 %v528
        %v598 = vunpack.c.h.bf16 %v528
        %v599 = vunpack.c.l.bf16 %v529
        %v600 = vunpack.c.h.bf16 %v529
        %v601 = vunpack.c.l.bf16 %v530
        %v602 = vunpack.c.h.bf16 %v530
        %v603 = vunpack.c.l.bf16 %v531
        %v604 = vunpack.c.h.bf16 %v531
        %v605 = vunpack.c.l.bf16 %v532
        %v606 = vunpack.c.h.bf16 %v532
        %v607 = vunpack.c.l.bf16 %v533
        %v608 = vunpack.c.h.bf16 %v533
        %v609 = vunpack.c.l.bf16 %v534
        %v610 = vunpack.c.h.bf16 %v534
        %v611 = vunpack.c.l.bf16 %v535
        %v612 = vunpack.c.h.bf16 %v535
        %v613 = vunpack.c.l.bf16 %v536
        %v614 = vunpack.c.h.bf16 %v536
        %v615 = vunpack.c.l.bf16 %v537
        %v616 = vunpack.c.h.bf16 %v537
        %v617 = vunpack.c.l.bf16 %v538
        %v618 = vunpack.c.h.bf16 %v538
        %v619 = vunpack.c.l.bf16 %v539
        %v620 = vunpack.c.h.bf16 %v539
        %v621 = vunpack.c.l.bf16 %v540
        %v622 = vunpack.c.h.bf16 %v540
        %v623 = vunpack.c.l.bf16 %v541
        %v624 = vunpack.c.h.bf16 %v541
        %v625 = vunpack.c.l.bf16 %v542
        %v626 = vunpack.c.h.bf16 %v542
        %v627 = vunpack.c.l.bf16 %v543
        %v628 = vunpack.c.h.bf16 %v543
        %v629 = vunpack.c.l.bf16 %v544
        %v630 = vunpack.c.h.bf16 %v544
        %v631 = vunpack.c.l.bf16 %v545
        %v632 = vunpack.c.h.bf16 %v545
        %v633 = vunpack.c.l.bf16 %v546
        %v634 = vunpack.c.h.bf16 %v546
        %v635 = vunpack.c.l.bf16 %v547
        %v636 = vunpack.c.h.bf16 %v547
        %v637 = vunpack.c.l.bf16 %v548
        %v638 = vunpack.c.h.bf16 %v548
        %v639 = vunpack.c.l.bf16 %v549
        %v640 = vunpack.c.h.bf16 %v549
        %v641 = vunpack.c.l.bf16 %v550
        %v642 = vunpack.c.h.bf16 %v550
        %v643 = vunpack.c.l.bf16 %v551
        %v644 = vunpack.c.h.bf16 %v551
        %v645 = vunpack.c.l.bf16 %v552
        %v646 = vunpack.c.h.bf16 %v552
        %v647 = vunpack.c.l.bf16 %v553
        %v648 = vunpack.c.h.bf16 %v553
        %v649 = vunpack.c.l.bf16 %v554
        %v650 = vunpack.c.h.bf16 %v554
        %v651 = vstv %s265
        %v652 = vmul.f32 %v651, %v555
        %v653 = vmul.f32 %v651, %v556
        %v654 = vmul.f32 %v651, %v557
        %v655 = vmul.f32 %v651, %v558
        %v656 = vmul.f32 %v651, %v559
        %v657 = vmul.f32 %v651, %v560
        %v658 = vmul.f32 %v651, %v561
        %v659 = vmul.f32 %v651, %v562
        %v660 = vmul.f32 %v651, %v563
        %v661 = vmul.f32 %v651, %v564
        %v662 = vmul.f32 %v651, %v565
        %v663 = vmul.f32 %v651, %v566
        %v664 = vmul.f32 %v651, %v567
        %v665 = vmul.f32 %v651, %v568
        %v666 = vmul.f32 %v651, %v569
        %v667 = vmul.f32 %v651, %v570
        %v668 = vmul.f32 %v651, %v571
        %v669 = vmul.f32 %v651, %v572
        %v670 = vmul.f32 %v651, %v573
        %v671 = vmul.f32 %v651, %v574
        %v672 = vmul.f32 %v651, %v575
        %v673 = vmul.f32 %v651, %v576
        %v674 = vmul.f32 %v651, %v577
        %v675 = vmul.f32 %v651, %v578
        %v676 = vmul.f32 %v651, %v579
        %v677 = vmul.f32 %v651, %v580
        %v678 = vmul.f32 %v651, %v581
        %v679 = vmul.f32 %v651, %v582
        %v680 = vmul.f32 %v651, %v583
        %v681 = vmul.f32 %v651, %v584
        %v682 = vmul.f32 %v651, %v585
        %v683 = vmul.f32 %v651, %v586
        %v684 = vmul.f32 %v651, %v587
        %v685 = vmul.f32 %v651, %v588
        %v686 = vmul.f32 %v651, %v589
        %v687 = vmul.f32 %v651, %v590
        %v688 = vmul.f32 %v651, %v591
        %v689 = vmul.f32 %v651, %v592
        %v690 = vmul.f32 %v651, %v593
        %v691 = vmul.f32 %v651, %v594
        %v692 = vmul.f32 %v651, %v595
        %v693 = vmul.f32 %v651, %v596
        %v694 = vmul.f32 %v651, %v597
        %v695 = vmul.f32 %v651, %v598
        %v696 = vmul.f32 %v651, %v599
        %v697 = vmul.f32 %v651, %v600
        %v698 = vmul.f32 %v651, %v601
        %v699 = vmul.f32 %v651, %v602
        %v700 = vmul.f32 %v651, %v603
        %v701 = vmul.f32 %v651, %v604
        %v702 = vmul.f32 %v651, %v605
        %v703 = vmul.f32 %v651, %v606
        %v704 = vmul.f32 %v651, %v607
        %v705 = vmul.f32 %v651, %v608
        %v706 = vmul.f32 %v651, %v609
        %v707 = vmul.f32 %v651, %v610
        %v708 = vmul.f32 %v651, %v611
        %v709 = vmul.f32 %v651, %v612
        %v710 = vmul.f32 %v651, %v613
        %v711 = vmul.f32 %v651, %v614
        %v712 = vmul.f32 %v651, %v615
        %v713 = vmul.f32 %v651, %v616
        %v714 = vmul.f32 %v651, %v617
        %v715 = vmul.f32 %v651, %v618
        %v716 = vmul.f32 %v651, %v619
        %v717 = vmul.f32 %v651, %v620
        %v718 = vmul.f32 %v651, %v621
        %v719 = vmul.f32 %v651, %v622
        %v720 = vmul.f32 %v651, %v623
        %v721 = vmul.f32 %v651, %v624
        %v722 = vmul.f32 %v651, %v625
        %v723 = vmul.f32 %v651, %v626
        %v724 = vmul.f32 %v651, %v627
        %v725 = vmul.f32 %v651, %v628
        %v726 = vmul.f32 %v651, %v629
        %v727 = vmul.f32 %v651, %v630
        %v728 = vmul.f32 %v651, %v631
        %v729 = vmul.f32 %v651, %v632
        %v730 = vmul.f32 %v651, %v633
        %v731 = vmul.f32 %v651, %v634
        %v732 = vmul.f32 %v651, %v635
        %v733 = vmul.f32 %v651, %v636
        %v734 = vmul.f32 %v651, %v637
        %v735 = vmul.f32 %v651, %v638
        %v736 = vmul.f32 %v651, %v639
        %v737 = vmul.f32 %v651, %v640
        %v738 = vmul.f32 %v651, %v641
        %v739 = vmul.f32 %v651, %v642
        %v740 = vmul.f32 %v651, %v643
        %v741 = vmul.f32 %v651, %v644
        %v742 = vmul.f32 %v651, %v645
        %v743 = vmul.f32 %v651, %v646
        %v744 = vmul.f32 %v651, %v647
        %v745 = vmul.f32 %v651, %v648
        %v746 = vmul.f32 %v651, %v649
        %v747 = vmul.f32 %v651, %v650
        %v748 = vadd.f32 %v411, %v652
        %v749 = vadd.f32 %v412, %v653
        %v750 = vadd.f32 %v413, %v654
        %v751 = vadd.f32 %v414, %v655
        %v752 = vadd.f32 %v415, %v656
        %v753 = vadd.f32 %v416, %v657
        %v754 = vadd.f32 %v417, %v658
        %v755 = vadd.f32 %v418, %v659
        %v756 = vadd.f32 %v419, %v660
        %v757 = vadd.f32 %v420, %v661
        %v758 = vadd.f32 %v421, %v662
        %v759 = vadd.f32 %v422, %v663
        %v760 = vadd.f32 %v423, %v664
        %v761 = vadd.f32 %v424, %v665
        %v762 = vadd.f32 %v425, %v666
        %v763 = vadd.f32 %v426, %v667
        %v764 = vadd.f32 %v427, %v668
        %v765 = vadd.f32 %v428, %v669
        %v766 = vadd.f32 %v429, %v670
        %v767 = vadd.f32 %v430, %v671
        %v768 = vadd.f32 %v431, %v672
        %v769 = vadd.f32 %v432, %v673
        %v770 = vadd.f32 %v433, %v674
        %v771 = vadd.f32 %v434, %v675
        %v772 = vadd.f32 %v435, %v676
        %v773 = vadd.f32 %v436, %v677
        %v774 = vadd.f32 %v437, %v678
        %v775 = vadd.f32 %v438, %v679
        %v776 = vadd.f32 %v439, %v680
        %v777 = vadd.f32 %v440, %v681
        %v778 = vadd.f32 %v441, %v682
        %v779 = vadd.f32 %v442, %v683
        %v780 = vadd.f32 %v443, %v684
        %v781 = vadd.f32 %v444, %v685
        %v782 = vadd.f32 %v445, %v686
        %v783 = vadd.f32 %v446, %v687
        %v784 = vadd.f32 %v447, %v688
        %v785 = vadd.f32 %v448, %v689
        %v786 = vadd.f32 %v449, %v690
        %v787 = vadd.f32 %v450, %v691
        %v788 = vadd.f32 %v451, %v692
        %v789 = vadd.f32 %v452, %v693
        %v790 = vadd.f32 %v453, %v694
        %v791 = vadd.f32 %v454, %v695
        %v792 = vadd.f32 %v455, %v696
        %v793 = vadd.f32 %v456, %v697
        %v794 = vadd.f32 %v457, %v698
        %v795 = vadd.f32 %v458, %v699
        %v796 = vadd.f32 %v459, %v700
        %v797 = vadd.f32 %v460, %v701
        %v798 = vadd.f32 %v461, %v702
        %v799 = vadd.f32 %v462, %v703
        %v800 = vadd.f32 %v463, %v704
        %v801 = vadd.f32 %v464, %v705
        %v802 = vadd.f32 %v465, %v706
        %v803 = vadd.f32 %v466, %v707
        %v804 = vadd.f32 %v467, %v708
        %v805 = vadd.f32 %v468, %v709
        %v806 = vadd.f32 %v469, %v710
        %v807 = vadd.f32 %v470, %v711
        %v808 = vadd.f32 %v471, %v712
        %v809 = vadd.f32 %v472, %v713
        %v810 = vadd.f32 %v473, %v714
        %v811 = vadd.f32 %v474, %v715
        %v812 = vadd.f32 %v475, %v716
        %v813 = vadd.f32 %v476, %v717
        %v814 = vadd.f32 %v477, %v718
        %v815 = vadd.f32 %v478, %v719
        %v816 = vadd.f32 %v479, %v720
        %v817 = vadd.f32 %v480, %v721
        %v818 = vadd.f32 %v481, %v722
        %v819 = vadd.f32 %v482, %v723
        %v820 = vadd.f32 %v483, %v724
        %v821 = vadd.f32 %v484, %v725
        %v822 = vadd.f32 %v485, %v726
        %v823 = vadd.f32 %v486, %v727
        %v824 = vadd.f32 %v487, %v728
        %v825 = vadd.f32 %v488, %v729
        %v826 = vadd.f32 %v489, %v730
        %v827 = vadd.f32 %v490, %v731
        %v828 = vadd.f32 %v491, %v732
        %v829 = vadd.f32 %v492, %v733
        %v830 = vadd.f32 %v493, %v734
        %v831 = vadd.f32 %v494, %v735
        %v832 = vadd.f32 %v495, %v736
        %v833 = vadd.f32 %v496, %v737
        %v834 = vadd.f32 %v497, %v738
        %v835 = vadd.f32 %v498, %v739
        %v836 = vadd.f32 %v499, %v740
        %v837 = vadd.f32 %v500, %v741
        %v838 = vadd.f32 %v501, %v742
        %v839 = vadd.f32 %v502, %v743
        %v840 = vadd.f32 %v503, %v744
        %v841 = vadd.f32 %v504, %v745
        %v842 = vadd.f32 %v505, %v746
        %v843 = vadd.f32 %v506, %v747
        %844 = vst [vmem:[%s260] sm:$0xff] %v748
        %845 = vst [vmem:[%s260 + $0x8] sm:$0xff] %v749
        %846 = vst [vmem:[%s260 + $0x10] sm:$0xff] %v750
        %847 = vst [vmem:[%s260 + $0x18] sm:$0xff] %v751
        %848 = vst [vmem:[%s260 + $0x20] sm:$0xff] %v752
        %849 = vst [vmem:[%s260 + $0x28] sm:$0xff] %v753
        %850 = vst [vmem:[%s260 + $0x30] sm:$0xff] %v754
        %851 = vst [vmem:[%s260 + $0x38] sm:$0xff] %v755
        %852 = vst [vmem:[%s260 + $0x40] sm:$0xff] %v756
        %853 = vst [vmem:[%s260 + $0x48] sm:$0xff] %v757
        %854 = vst [vmem:[%s260 + $0x50] sm:$0xff] %v758
        %855 = vst [vmem:[%s260 + $0x58] sm:$0xff] %v759
        %856 = vst [vmem:[%s260 + $0x60] sm:$0xff] %v760
        %857 = vst [vmem:[%s260 + $0x68] sm:$0xff] %v761
        %858 = vst [vmem:[%s260 + $0x70] sm:$0xff] %v762
        %859 = vst [vmem:[%s260 + $0x78] sm:$0xff] %v763
        %860 = vst [vmem:[%s260 + $0x80] sm:$0xff] %v764
        %861 = vst [vmem:[%s260 + $0x88] sm:$0xff] %v765
        %862 = vst [vmem:[%s260 + $0x90] sm:$0xff] %v766
        %863 = vst [vmem:[%s260 + $0x98] sm:$0xff] %v767
        %864 = vst [vmem:[%s260 + $0xa0] sm:$0xff] %v768
        %865 = vst [vmem:[%s260 + $0xa8] sm:$0xff] %v769
        %866 = vst [vmem:[%s260 + $0xb0] sm:$0xff] %v770
        %vm867 = vcmask 330752
        %868 = vst.msk [vmem:[%s260 + $0xb8] sm:$0xf] %vm867, %v771
        %869 = vst [vmem:[%s260 + $0xbc] sm:$0xff] %v772
        %870 = vst [vmem:[%s260 + $0xc4] sm:$0xff] %v773
        %871 = vst [vmem:[%s260 + $0xcc] sm:$0xff] %v774
        %872 = vst [vmem:[%s260 + $0xd4] sm:$0xff] %v775
        %873 = vst [vmem:[%s260 + $0xdc] sm:$0xff] %v776
        %874 = vst [vmem:[%s260 + $0xe4] sm:$0xff] %v777
        %875 = vst [vmem:[%s260 + $0xec] sm:$0xff] %v778
        %876 = vst [vmem:[%s260 + $0xf4] sm:$0xff] %v779
        %877 = vst [vmem:[%s260 + $0xfc] sm:$0xff] %v780
        %878 = vst [vmem:[%s260 + $0x104] sm:$0xff] %v781
        %879 = vst [vmem:[%s260 + $0x10c] sm:$0xff] %v782
        %880 = vst [vmem:[%s260 + $0x114] sm:$0xff] %v783
        %881 = vst [vmem:[%s260 + $0x11c] sm:$0xff] %v784
        %882 = vst [vmem:[%s260 + $0x124] sm:$0xff] %v785
        %883 = vst [vmem:[%s260 + $0x12c] sm:$0xff] %v786
        %884 = vst [vmem:[%s260 + $0x134] sm:$0xff] %v787
        %885 = vst [vmem:[%s260 + $0x13c] sm:$0xff] %v788
        %886 = vst [vmem:[%s260 + $0x144] sm:$0xff] %v789
        %887 = vst [vmem:[%s260 + $0x14c] sm:$0xff] %v790
        %888 = vst [vmem:[%s260 + $0x154] sm:$0xff] %v791
        %889 = vst [vmem:[%s260 + $0x15c] sm:$0xff] %v792
        %890 = vst [vmem:[%s260 + $0x164] sm:$0xff] %v793
        %891 = vst [vmem:[%s260 + $0x16c] sm:$0xff] %v794
        %892 = vst.msk [vmem:[%s260 + $0x174] sm:$0xf] %vm867, %v795
        %893 = vst [vmem:[%s260 + $0x178] sm:$0xff] %v796
        %894 = vst [vmem:[%s260 + $0x180] sm:$0xff] %v797
        %895 = vst [vmem:[%s260 + $0x188] sm:$0xff] %v798
        %896 = vst [vmem:[%s260 + $0x190] sm:$0xff] %v799
        %897 = vst [vmem:[%s260 + $0x198] sm:$0xff] %v800
        %898 = vst [vmem:[%s260 + $0x1a0] sm:$0xff] %v801
        %899 = vst [vmem:[%s260 + $0x1a8] sm:$0xff] %v802
        %900 = vst [vmem:[%s260 + $0x1b0] sm:$0xff] %v803
        %901 = vst [vmem:[%s260 + $0x1b8] sm:$0xff] %v804
        %902 = vst [vmem:[%s260 + $0x1c0] sm:$0xff] %v805
        %903 = vst [vmem:[%s260 + $0x1c8] sm:$0xff] %v806
        %904 = vst [vmem:[%s260 + $0x1d0] sm:$0xff] %v807
        %905 = vst [vmem:[%s260 + $0x1d8] sm:$0xff] %v808
        %906 = vst [vmem:[%s260 + $0x1e0] sm:$0xff] %v809
        %907 = vst [vmem:[%s260 + $0x1e8] sm:$0xff] %v810
        %908 = vst [vmem:[%s260 + $0x1f0] sm:$0xff] %v811
        %909 = vst [vmem:[%s260 + $0x1f8] sm:$0xff] %v812
        %910 = vst [vmem:[%s260 + $0x200] sm:$0xff] %v813
        %911 = vst [vmem:[%s260 + $0x208] sm:$0xff] %v814
        %912 = vst [vmem:[%s260 + $0x210] sm:$0xff] %v815
        %913 = vst [vmem:[%s260 + $0x218] sm:$0xff] %v816
        %914 = vst [vmem:[%s260 + $0x220] sm:$0xff] %v817
        %915 = vst [vmem:[%s260 + $0x228] sm:$0xff] %v818
        %916 = vst.msk [vmem:[%s260 + $0x230] sm:$0xf] %vm867, %v819
        %917 = vst [vmem:[%s260 + $0x234] sm:$0xff] %v820
        %918 = vst [vmem:[%s260 + $0x23c] sm:$0xff] %v821
        %919 = vst [vmem:[%s260 + $0x244] sm:$0xff] %v822
        %920 = vst [vmem:[%s260 + $0x24c] sm:$0xff] %v823
        %921 = vst [vmem:[%s260 + $0x254] sm:$0xff] %v824
        %922 = vst [vmem:[%s260 + $0x25c] sm:$0xff] %v825
        %923 = vst [vmem:[%s260 + $0x264] sm:$0xff] %v826
        %924 = vst [vmem:[%s260 + $0x26c] sm:$0xff] %v827
        %925 = vst [vmem:[%s260 + $0x274] sm:$0xff] %v828
        %926 = vst [vmem:[%s260 + $0x27c] sm:$0xff] %v829
        %927 = vst [vmem:[%s260 + $0x284] sm:$0xff] %v830
        %928 = vst [vmem:[%s260 + $0x28c] sm:$0xff] %v831
        %929 = vst [vmem:[%s260 + $0x294] sm:$0xff] %v832
        %930 = vst [vmem:[%s260 + $0x29c] sm:$0xff] %v833
        %931 = vst [vmem:[%s260 + $0x2a4] sm:$0xff] %v834
        %932 = vst [vmem:[%s260 + $0x2ac] sm:$0xff] %v835
        %933 = vst [vmem:[%s260 + $0x2b4] sm:$0xff] %v836
        %934 = vst [vmem:[%s260 + $0x2bc] sm:$0xff] %v837
        %935 = vst [vmem:[%s260 + $0x2c4] sm:$0xff] %v838
        %936 = vst [vmem:[%s260 + $0x2cc] sm:$0xff] %v839
        %937 = vst [vmem:[%s260 + $0x2d4] sm:$0xff] %v840
        %938 = vst [vmem:[%s260 + $0x2dc] sm:$0xff] %v841
        %939 = vst [vmem:[%s260 + $0x2e4] sm:$0xff] %v842
        %940 = vst.msk [vmem:[%s260 + $0x2ec] sm:$0xf] %vm867, %v843
        %s941 = sand.u32 %s138, 1
        %s942 = scalar_lea.sflag [#allocation4], %s941
        %s943 = sand.u32 %s138, 1
        %s944 = smul.addr %s943, 752
        %s945 = scalar_lea.vmem [#allocation11], %s944
        // Predicated region
        $region53: #{tpu_custom_call.1} parent=35 // pred_check
          %p946 = pneg %p148
        $region54: #{tpu_custom_call.1} parent=35 // pred_check_branch
          %948 = sbr.rel (%p946) target = $region56
        $region55: #{tpu_custom_call.1} parent=35 // pred_region
          %s949 = smul.u32 4, %s26
          %s951 = ssub.s32 12032, 12032
          %952 = vsyncadd %s942, %s951
          %s953 = smul.addr %s27, 47
          %s954 = smul.addr %s949, 188
          %s955 = sadd.s32 %s953, %s954
          %s956 = smul.addr %s955, 64
          %s957 = scalar_lea.hbm %s4, %s956
          %s958 = sshll.u32 %s945, 4
          %s959 = int_to_ptr.vmem [resolvable:$true] %s958
          %964 = dma.vmem_to_hbm [thread:$0]  %s959, 12032, %s957, %s942, 3008, 12032, 188
        $region56: #{tpu_custom_call.1} parent=35 // pred_fallthru
          _
      $region36: #{tpu_custom_call.1} parent=5 // pred_fallthru
        _
      %p965 = scmp.le.s32.totalorder 2, %s17
      // Predicated region
      $region57: #{tpu_custom_call.1} parent=5 // pred_check
        %p966 = pneg %p965
      $region58: #{tpu_custom_call.1} parent=5 // pred_check_branch
        %968 = sbr.rel (%p966) target = $region60
      $region59: #{tpu_custom_call.1} parent=5 // pred_region
        %s969 = ssub.s32 %s17, 2
        // Predicated region
        $region61: #{tpu_custom_call.1} parent=59 // pred_check
          %p970 = pneg %p154
        $region62: #{tpu_custom_call.1} parent=59 // pred_check_branch
          %972 = sbr.rel (%p970) target = $region64
        $region63: #{tpu_custom_call.1} parent=59 // pred_region
          %s973 = sand.u32 %s139, 1
          %s974 = scalar_lea.sflag [#allocation4], %s973
          %s975 = sand.u32 %s139, 1
          %s976 = smul.addr %s975, 752
          %s977 = scalar_lea.vmem [#allocation11], %s976
          %978 = dma.done %s974, 12032
        $region64: #{tpu_custom_call.1} parent=59 // pred_fallthru
          _
      $region60: #{tpu_custom_call.1} parent=5 // pred_fallthru
        _
    $region6: #{tpu_custom_call.1} parent=1 // loop_footer
      %s21 = sadd.s32 1, %s17
    $region7: #{tpu_custom_call.1} parent=1 // loop_footer_branch
      %16 = sbr.rel target = $region3
    $region8: #{tpu_custom_call.1} parent=1 // loop_exit
      _
    %979 = vsyncpa [#allocation3], 1
    %s980 = scalar_lea.sflag [#allocation3], 1
    %981 = vsyncpa %s980, 1
    %982 = vsyncpa [#allocation10], 1
    %983 = vsyncpa [#allocation4], 1
    %s984 = scalar_lea.sflag [#allocation4], 1
    %985 = vsyncpa %s984, 1
    %986 = vsyncpa [#allocation5], 1
    %s987 = scalar_lea.sflag [#allocation5], 1
    %988 = vsyncpa %s987, 1
    %989 = vsyncpa [#allocation7], 1

</llo_original>
